<compile_context>
chip_gen: v7x
topology: tpu7x:2x2x1
jax: 0.10.0
libtpu: 0.0.40
codegen_flags: <defaults>
</compile_context>

<pallas_src>
import functools

import jax
import jax.numpy as jnp
from jax.experimental import pallas as pl
from jax.experimental.pallas import tpu as pltpu


def se_kernel(x_ref, w1t_ref, b1_ref, w2t_ref, b2_ref, o_ref):
    # x_ref/o_ref: (Bt, C, HW)
    # w1t_ref: (C, Cr)  b1_ref: (1, Cr)  w2t_ref: (Cr, C)  b2_ref: (1, C)
    x = x_ref[...]

    # squeeze: global average pool over the spatial (lane) axis, f32 accumulation,
    # without materializing an f32 copy of x.
    inv_hw = 1.0 / x.shape[2]
    s = jnp.sum(x, axis=2, dtype=jnp.float32) * inv_hw                   # (Bt, C)

    # excitation: fc1 -> relu -> fc2 -> sigmoid (f32 math, weights pre-transposed).
    h = jnp.dot(s, w1t_ref[...], preferred_element_type=jnp.float32) + b1_ref[...]
    h = jnp.maximum(h, 0.0)                                              # (Bt, Cr)
    g = jnp.dot(h, w2t_ref[...], preferred_element_type=jnp.float32) + b2_ref[...]
    g = jax.nn.sigmoid(g)                                                # (Bt, C)

    # scale: per-channel gate broadcast over spatial positions, native dtype.
    o_ref[...] = x * g.astype(x.dtype)[:, :, None]


def _pick_batch_tile(B, row_bytes, target_block_bytes=4 << 20):
    """Largest divisor of B whose block fits the budget; prefer grid >= 2 steps."""
    divisors = [d for d in range(1, B + 1) if B % d == 0]
    fits = [d for d in divisors if d * row_bytes <= target_block_bytes] or [1]
    pref = [d for d in fits if B // d >= 2]   # keep >=2 grid steps for megacore
    return max(pref) if pref else max(fits)


def se_layer(x, w1, b1, w2, b2):
    """x: (B, C, H, W) NCHW (f32 or bf16).  w1: (Cr, C), b1: (Cr,), w2: (C, Cr), b2: (C,)."""
    B, C, H, W = x.shape
    Cr = w1.shape[0]
    HW = H * W
    itemsize = jnp.dtype(x.dtype).itemsize

    row_bytes = C * HW * itemsize
    Bt = _pick_batch_tile(B, row_bytes)
    grid = (B // Bt,)

    x3 = x.reshape(B, C, HW)                       # free reshape, no data movement
    x_block = (Bt, C, HW)

    w1t = jnp.asarray(w1, jnp.float32).T           # (C, Cr)
    w2t = jnp.asarray(w2, jnp.float32).T           # (Cr, C)
    b1r = jnp.asarray(b1, jnp.float32).reshape(1, Cr)
    b2r = jnp.asarray(b2, jnp.float32).reshape(1, C)

    block_bytes = Bt * row_bytes
    weight_bytes = (C * Cr * 2 + C + Cr) * 4
    # in + out, double buffered, plus resident weights and headroom; stays well
    # under v7x's 64 MiB physical VMEM for any block <= the 4 MiB target.
    vmem_limit = int(min(64 << 20,
                         max(4 * block_bytes + 4 * weight_bytes + (4 << 20),
                             16 << 20)))

    cost = pl.CostEstimate(
        flops=int(4 * B * C * Cr + 3 * B * C * HW),
        transcendentals=int(B * C),
        bytes_accessed=int(2 * B * C * HW * itemsize + weight_bytes),
    )

    out3 = pl.pallas_call(
        se_kernel,
        out_shape=jax.ShapeDtypeStruct(x3.shape, x.dtype),
        grid_spec=pltpu.PrefetchScalarGridSpec(
            num_scalar_prefetch=0,
            grid=grid,
            in_specs=[
                pl.BlockSpec(x_block, lambda b: (b, 0, 0)),
                pl.BlockSpec((C, Cr), lambda b: (0, 0)),
                pl.BlockSpec((1, Cr), lambda b: (0, 0)),
                pl.BlockSpec((Cr, C), lambda b: (0, 0)),
                pl.BlockSpec((1, C), lambda b: (0, 0)),
            ],
            out_specs=pl.BlockSpec(x_block, lambda b: (b, 0, 0)),
        ),
        compiler_params=pltpu.CompilerParams(
            dimension_semantics=("parallel",),
            vmem_limit_bytes=vmem_limit,
        ),
        cost_estimate=cost,
    )(x3, w1t, b1r, w2t, b2r)

    return out3.reshape(B, C, H, W)


def se_layer_ref(x, w1, b1, w2, b2):
    """Pure-JAX reference matching the PyTorch SELayer forward."""
    B, C, H, W = x.shape
    xf = x.astype(jnp.float32)
    s = xf.reshape(B, C, -1).mean(axis=2)                     # (B, C)
    h = jax.nn.relu(s @ w1.T + b1)                            # (B, Cr)
    g = jax.nn.sigmoid(h @ w2.T + b2)                         # (B, C)
    return xf * g[:, :, None, None]


if __name__ == "__main__":
    # SE block shapes as used inside TEM / QCO_1d: SELayer(128, reduction_ratio=8).
    B, C, H, W = 2, 128, 16, 16
    reduction_ratio = 8
    Cr = C // reduction_ratio

    key = jax.random.PRNGKey(0)
    kx, k1, k2, k3, k4 = jax.random.split(key, 5)
    x = jax.random.normal(kx, (B, C, H, W), dtype=jnp.float32)

    # Deterministic parameter init (PyTorch Linear-style uniform +-1/sqrt(fan_in)).
    lim1 = 1.0 / jnp.sqrt(jnp.float32(C))
    lim2 = 1.0 / jnp.sqrt(jnp.float32(Cr))
    w1 = jax.random.uniform(k1, (Cr, C), jnp.float32, -lim1, lim1)
    b1 = jax.random.uniform(k2, (Cr,), jnp.float32, -lim1, lim1)
    w2 = jax.random.uniform(k3, (C, Cr), jnp.float32, -lim2, lim2)
    b2 = jax.random.uniform(k4, (C,), jnp.float32, -lim2, lim2)

    # 1) f32, lane-dense spatial extent (HW = 256 is a multiple of 128).
    out = se_layer(x, w1, b1, w2, b2)
    jax.block_until_ready(out)
    ref = se_layer_ref(x, w1, b1, w2, b2)
    assert out.shape == (B, C, H, W)
    assert jnp.allclose(out, ref, atol=1e-5, rtol=1e-5), "f32 mismatch vs reference"

    # 2) bf16 I/O (squeeze/FC/sigmoid still f32 inside): half the HBM traffic.
    x_bf = x.astype(jnp.bfloat16)
    out_bf = se_layer(x_bf, w1, b1, w2, b2)
    jax.block_until_ready(out_bf)
    ref_bf = se_layer_ref(x_bf, w1, b1, w2, b2)
    assert out_bf.dtype == jnp.bfloat16
    assert jnp.allclose(out_bf.astype(jnp.float32), ref_bf, atol=5e-2, rtol=5e-2), \
        "bf16 mismatch vs reference"

    # 3) odd spatial extent (HW = 49): same single-pass layout, masked stores,
    #    no wrapper-side transpose passes.
    x_odd = jax.random.normal(kx, (B, C, 7, 7), dtype=jnp.float32)
    out_odd = se_layer(x_odd, w1, b1, w2, b2)
    jax.block_until_ready(out_odd)
    ref_odd = se_layer_ref(x_odd, w1, b1, w2, b2)
    assert jnp.allclose(out_odd, ref_odd, atol=1e-5, rtol=1e-5), \
        "odd-HW mismatch vs reference"

    print("KERNEL_OK")
</pallas_src>

<mosaic_0001>
module attributes {stable_mosaic.version = 11 : i64} {
  func.func @se_kernel(%arg0: i32, %arg1: memref<1x128x256xf32, #tpu.memory_space<vmem>>, %arg2: memref<128x16xf32, #tpu.memory_space<vmem>>, %arg3: memref<1x16xf32, #tpu.memory_space<vmem>>, %arg4: memref<16x128xf32, #tpu.memory_space<vmem>>, %arg5: memref<1x128xf32, #tpu.memory_space<vmem>>, %arg6: memref<1x128x256xf32, #tpu.memory_space<vmem>>) attributes {dimension_semantics = [#tpu.dimension_semantics<parallel>], iteration_bounds = array<i64: 2>, scalar_prefetch = 0 : i64, scratch_operands = 0 : i64, tpu.core_type = #tpu.core_type<tc>, window_params = [{transform_indices = @transform_0, window_bounds = array<i64: 1, 128, 256>}, {pipeline_mode = #tpu.pipeline_mode<synchronous>, transform_indices = @transform_1, window_bounds = array<i64: 128, 16>}, {pipeline_mode = #tpu.pipeline_mode<synchronous>, transform_indices = @transform_2, window_bounds = array<i64: 1, 16>}, {pipeline_mode = #tpu.pipeline_mode<synchronous>, transform_indices = @transform_3, window_bounds = array<i64: 16, 128>}, {pipeline_mode = #tpu.pipeline_mode<synchronous>, transform_indices = @transform_4, window_bounds = array<i64: 1, 128>}, {transform_indices = @transform_5, window_bounds = array<i64: 1, 128, 256>}]} {
    %c0 = arith.constant 0 : index
    %c0_0 = arith.constant 0 : index
    %c0_1 = arith.constant 0 : index
    %0 = vector.load %arg1[%c0, %c0_0, %c0_1] : memref<1x128x256xf32, #tpu.memory_space<vmem>>, vector<1x128x256xf32>
    %cst = arith.constant dense<0.000000e+00> : vector<1x128xf32>
    %1 = vector.multi_reduction <add>, %0, %cst [2] : vector<1x128x256xf32> to vector<1x128xf32>
    %cst_2 = arith.constant 3.906250e-03 : f32
    %2 = vector.broadcast %cst_2 : f32 to vector<1x128xf32>
    %3 = arith.mulf %1, %2 : vector<1x128xf32>
    %c0_3 = arith.constant 0 : index
    %c0_4 = arith.constant 0 : index
    %4 = vector.load %arg2[%c0_3, %c0_4] : memref<128x16xf32, #tpu.memory_space<vmem>>, vector<128x16xf32>
    %cst_5 = arith.constant dense<0.000000e+00> : vector<1x16xf32>
    %5 = tpu.matmul %3, %4, %cst_5 {dimension_numbers = #tpu.dot_dimension_numbers<[1], [0], [0], [1], [0, 0, 1, 1], [], []>} : vector<1x128xf32>, vector<128x16xf32>, vector<1x16xf32> -> vector<1x16xf32>
    %c0_6 = arith.constant 0 : index
    %c0_7 = arith.constant 0 : index
    %6 = vector.load %arg3[%c0_6, %c0_7] : memref<1x16xf32, #tpu.memory_space<vmem>>, vector<1x16xf32>
    %7 = arith.addf %5, %6 : vector<1x16xf32>
    %cst_8 = arith.constant 0.000000e+00 : f32
    %8 = vector.broadcast %cst_8 : f32 to vector<1x16xf32>
    %9 = arith.maximumf %7, %8 : vector<1x16xf32>
    %c0_9 = arith.constant 0 : index
    %c0_10 = arith.constant 0 : index
    %10 = vector.load %arg4[%c0_9, %c0_10] : memref<16x128xf32, #tpu.memory_space<vmem>>, vector<16x128xf32>
    %cst_11 = arith.constant dense<0.000000e+00> : vector<1x128xf32>
    %11 = tpu.matmul %9, %10, %cst_11 {dimension_numbers = #tpu.dot_dimension_numbers<[1], [0], [0], [1], [0, 0, 1, 1], [], []>} : vector<1x16xf32>, vector<16x128xf32>, vector<1x128xf32> -> vector<1x128xf32>
    %c0_12 = arith.constant 0 : index
    %c0_13 = arith.constant 0 : index
    %12 = vector.load %arg5[%c0_12, %c0_13] : memref<1x128xf32, #tpu.memory_space<vmem>>, vector<1x128xf32>
    %13 = arith.addf %11, %12 : vector<1x128xf32>
    %14 = arith.negf %13 : vector<1x128xf32>
    %15 = math.exp %14 : vector<1x128xf32>
    %cst_14 = arith.constant 1.000000e+00 : f32
    %16 = vector.broadcast %cst_14 : f32 to vector<1x128xf32>
    %17 = arith.addf %16, %15 : vector<1x128xf32>
    %18 = arith.divf %16, %17 : vector<1x128xf32>
    %19 = vector.shape_cast %18 : vector<1x128xf32> to vector<1x128x1xf32>
    %20 = vector.broadcast %19 : vector<1x128x1xf32> to vector<1x128x256xf32>
    %21 = arith.mulf %0, %20 : vector<1x128x256xf32>
    %c0_15 = arith.constant 0 : index
    %c0_16 = arith.constant 0 : index
    %c0_17 = arith.constant 0 : index
    %22 = vector.load %arg6[%c0_15, %c0_16, %c0_17] : memref<1x128x256xf32, #tpu.memory_space<vmem>>, vector<1x128x256xf32>
    tpu.vector_store %arg6[%c0_15, %c0_16, %c0_17], %21 {strides = array<i32>} : memref<1x128x256xf32, #tpu.memory_space<vmem>>, vector<1x128x256xf32>,
    return
  }
  func.func @transform_0(%arg0: i32) -> (i32, i32, i32) {
    %c0_i32 = arith.constant 0 : i32
    %c0_i32_0 = arith.constant 0 : i32
    %c0_i32_1 = arith.constant 0 : i32
    return %arg0, %c0_i32, %c0_i32_0 : i32, i32, i32
  }
  func.func @transform_1(%arg0: i32) -> (i32, i32) {
    %c0_i32 = arith.constant 0 : i32
    %c0_i32_0 = arith.constant 0 : i32
    %c0_i32_1 = arith.constant 0 : i32
    return %c0_i32, %c0_i32_0 : i32, i32
  }
  func.func @transform_2(%arg0: i32) -> (i32, i32) {
    %c0_i32 = arith.constant 0 : i32
    %c0_i32_0 = arith.constant 0 : i32
    %c0_i32_1 = arith.constant 0 : i32
    return %c0_i32, %c0_i32_0 : i32, i32
  }
  func.func @transform_3(%arg0: i32) -> (i32, i32) {
    %c0_i32 = arith.constant 0 : i32
    %c0_i32_0 = arith.constant 0 : i32
    %c0_i32_1 = arith.constant 0 : i32
    return %c0_i32, %c0_i32_0 : i32, i32
  }
  func.func @transform_4(%arg0: i32) -> (i32, i32) {
    %c0_i32 = arith.constant 0 : i32
    %c0_i32_0 = arith.constant 0 : i32
    %c0_i32_1 = arith.constant 0 : i32
    return %c0_i32, %c0_i32_0 : i32, i32
  }
  func.func @transform_5(%arg0: i32) -> (i32, i32, i32) {
    %c0_i32 = arith.constant 0 : i32
    %c0_i32_0 = arith.constant 0 : i32
    %c0_i32_1 = arith.constant 0 : i32
    return %arg0, %c0_i32, %c0_i32_0 : i32, i32, i32
  }
}

</mosaic_0001>

<llo_original>
// kernel: tpu_custom_call.1
$region0: #{tpu_custom_call.1}
  #allocation0 [shape = 'u32[]', space=smem, size = 0x4, offset = 0x4, fixed_abs, tag = 'smem constant byte address 0x4 - core index']
  #allocation1 [shape = 'u32[144,128]{1,0:T(1,128)}', space=vmem, size = 0x12000, scoped, tag = 'internal scratch']
  %s0 = inlined_call_operand.hbm [shape: f32[2,128,256], index: 0, kind: input, shape index: {}]
  %s1 = inlined_call_operand.vmem [shape: f32[128,16], index: 1, kind: input, shape index: {}]
  %s2 = inlined_call_operand.vmem [shape: f32[1,16], index: 2, kind: input, shape index: {}]
  %s3 = inlined_call_operand.vmem [shape: f32[16,128], index: 3, kind: input, shape index: {}]
  %s4 = inlined_call_operand.vmem [shape: f32[1,128], index: 4, kind: input, shape index: {}]
  %s5 = inlined_call_operand.hbm [shape: f32[2,128,256], index: 5, kind: output, shape index: {}]
  %s6 = sld [smem:[#allocation0]]
  $region57: #{tpu_custom_call.1} parent=0
    _
  %s8 = ssub.s32 1, %s6
  %s9 = scalar_select 0, %s8, %s6
  $region1: #{tpu_custom_call.1} parent=0
    #allocation2 [shape = 'u8[262144]{0}', space=vmem, size = 0x40000, scoped, tag = 'input window, operand 0']
    #allocation3 [shape = 's32[2]{0}', space=sflag, size = 0x8, scoped, tag = 'scoped memory for tpu_custom_call.1']
    #allocation4 [shape = 's32[2]{0}', space=sflag, size = 0x8, scoped, tag = 'scoped memory for tpu_custom_call.1']
    #allocation5 [shape = 'u8[262144]{0}', space=vmem, size = 0x40000, scoped, tag = 'output window, operand 0']
    %10 = vsyncpa [#allocation3], 0
    %s11 = scalar_lea.sflag [#allocation3], 1
    %12 = vsyncpa %s11, 0
    %13 = vsyncpa [#allocation4], 0
    %s14 = scalar_lea.sflag [#allocation4], 1
    %15 = vsyncpa %s14, 0
    loop: start=0, step=1, limit=4
    $region2: #{tpu_custom_call.1} parent=1 // loop_pre_header
      _
    $region3: #{tpu_custom_call.1} parent=1 // loop_header
      %s17 = sphi 0, %s21
      %p18 = scmp.ge.s32.totalorder %s17, 4
      %s27 = sphi 0, %s29
      %s30 = sphi 0, %s27
      %s31 = sphi 0, %s30
      %s47 = sphi 0, %s31
      %s51 = sphi 0, %s51
      %s53 = sphi 0, %s51
      %s54 = sphi 0, %s53
      %s68 = sphi 0, %s54
      %s72 = sphi 0, %s72
      %s74 = sphi 0, %s72
      %s75 = sphi 0, %s74
      %s89 = sphi 0, %s75
      %s93 = sphi 0, %s93
      %s95 = sphi 0, %s93
      %s96 = sphi 0, %s95
      %s110 = sphi 0, %s96
      %s114 = sphi 0, %s114
      %s116 = sphi 0, %s114
      %s117 = sphi 0, %s116
      %s131 = sphi 0, %s117
      %s137 = sphi 0, %s139
      %s140 = sphi 0, %s137
      %s141 = sphi 0, %s140
      %s157 = sphi 0, %s141
    $region4: #{tpu_custom_call.1} parent=1 // loop_header_branch
      %20 = sbr.rel (%p18) target = $region8
    $region5: #{tpu_custom_call.1} parent=1 // loop_body
      %s22 = ssub.s32 %s17, 1
      %s23 = ssub.s32 %s17, 2
      %s24 = sadd.s32 %s17, 1
      %s25 = ssub.s32 %s17, %s24
      %p26 = scmp.eq.s32.totalorder %s25, 0
      %s28 = sadd.s32 %s27, 1
      %s29 = scalar_select %p26, %s27, %s28
      %p32 = pneg %p26
      %p33 = scmp.eq.s32.totalorder %s17, 1
      %p34 = por %p32, %p33
      %p35 = scmp.ne.s32.totalorder %s27, %s30
      %p36 = scmp.eq.s32.totalorder %s17, 0
      %p37 = por %p35, %p36
      %p38 = scmp.ne.s32.totalorder %s27, %s30
      %p39 = scmp.eq.s32.totalorder %s22, 1
      %p40 = por %p38, %p39
      %p41 = scmp.ne.s32.totalorder %s30, %s31
      %p42 = scmp.eq.s32.totalorder %s22, 0
      %p43 = por %p41, %p42
      %p44 = scmp.ne.s32.totalorder %s30, %s31
      %p45 = scmp.eq.s32.totalorder %s23, 1
      %p46 = por %p44, %p45
      %p48 = scmp.ne.s32.totalorder %s31, %s47
      %p49 = scmp.eq.s32.totalorder %s23, 0
      %p50 = por %p48, %p49
      %s52 = sadd.s32 %s51, 1
      %p55 = scmp.eq.s32.totalorder %s17, 1
      %p56 = scmp.ne.s32.totalorder %s51, %s53
      %p57 = scmp.eq.s32.totalorder %s17, 0
      %p58 = por %p56, %p57
      %p59 = scmp.ne.s32.totalorder %s51, %s53
      %p60 = scmp.eq.s32.totalorder %s22, 1
      %p61 = por %p59, %p60
      %p62 = scmp.ne.s32.totalorder %s53, %s54
      %p63 = scmp.eq.s32.totalorder %s22, 0
      %p64 = por %p62, %p63
      %p65 = scmp.ne.s32.totalorder %s53, %s54
      %p66 = scmp.eq.s32.totalorder %s23, 1
      %p67 = por %p65, %p66
      %p69 = scmp.ne.s32.totalorder %s54, %s68
      %p70 = scmp.eq.s32.totalorder %s23, 0
      %p71 = por %p69, %p70
      %s73 = sadd.s32 %s72, 1
      %p76 = scmp.eq.s32.totalorder %s17, 1
      %p77 = scmp.ne.s32.totalorder %s72, %s74
      %p78 = scmp.eq.s32.totalorder %s17, 0
      %p79 = por %p77, %p78
      %p80 = scmp.ne.s32.totalorder %s72, %s74
      %p81 = scmp.eq.s32.totalorder %s22, 1
      %p82 = por %p80, %p81
      %p83 = scmp.ne.s32.totalorder %s74, %s75
      %p84 = scmp.eq.s32.totalorder %s22, 0
      %p85 = por %p83, %p84
      %p86 = scmp.ne.s32.totalorder %s74, %s75
      %p87 = scmp.eq.s32.totalorder %s23, 1
      %p88 = por %p86, %p87
      %p90 = scmp.ne.s32.totalorder %s75, %s89
      %p91 = scmp.eq.s32.totalorder %s23, 0
      %p92 = por %p90, %p91
      %s94 = sadd.s32 %s93, 1
      %p97 = scmp.eq.s32.totalorder %s17, 1
      %p98 = scmp.ne.s32.totalorder %s93, %s95
      %p99 = scmp.eq.s32.totalorder %s17, 0
      %p100 = por %p98, %p99
      %p101 = scmp.ne.s32.totalorder %s93, %s95
      %p102 = scmp.eq.s32.totalorder %s22, 1
      %p103 = por %p101, %p102
      %p104 = scmp.ne.s32.totalorder %s95, %s96
      %p105 = scmp.eq.s32.totalorder %s22, 0
      %p106 = por %p104, %p105
      %p107 = scmp.ne.s32.totalorder %s95, %s96
      %p108 = scmp.eq.s32.totalorder %s23, 1
      %p109 = por %p107, %p108
      %p111 = scmp.ne.s32.totalorder %s96, %s110
      %p112 = scmp.eq.s32.totalorder %s23, 0
      %p113 = por %p111, %p112
      %s115 = sadd.s32 %s114, 1
      %p118 = scmp.eq.s32.totalorder %s17, 1
      %p119 = scmp.ne.s32.totalorder %s114, %s116
      %p120 = scmp.eq.s32.totalorder %s17, 0
      %p121 = por %p119, %p120
      %p122 = scmp.ne.s32.totalorder %s114, %s116
      %p123 = scmp.eq.s32.totalorder %s22, 1
      %p124 = por %p122, %p123
      %p125 = scmp.ne.s32.totalorder %s116, %s117
      %p126 = scmp.eq.s32.totalorder %s22, 0
      %p127 = por %p125, %p126
      %p128 = scmp.ne.s32.totalorder %s116, %s117
      %p129 = scmp.eq.s32.totalorder %s23, 1
      %p130 = por %p128, %p129
      %p132 = scmp.ne.s32.totalorder %s117, %s131
      %p133 = scmp.eq.s32.totalorder %s23, 0
      %p134 = por %p132, %p133
      %s135 = ssub.s32 %s17, %s24
      %p136 = scmp.eq.s32.totalorder %s135, 0
      %s138 = sadd.s32 %s137, 1
      %s139 = scalar_select %p136, %s137, %s138
      %p142 = pneg %p136
      %p143 = scmp.eq.s32.totalorder %s17, 1
      %p144 = por %p142, %p143
      %p145 = scmp.ne.s32.totalorder %s137, %s140
      %p146 = scmp.eq.s32.totalorder %s17, 0
      %p147 = por %p145, %p146
      %p148 = scmp.ne.s32.totalorder %s137, %s140
      %p149 = scmp.eq.s32.totalorder %s22, 1
      %p150 = por %p148, %p149
      %p151 = scmp.ne.s32.totalorder %s140, %s141
      %p152 = scmp.eq.s32.totalorder %s22, 0
      %p153 = por %p151, %p152
      %p154 = scmp.ne.s32.totalorder %s140, %s141
      %p155 = scmp.eq.s32.totalorder %s23, 1
      %p156 = por %p154, %p155
      %p158 = scmp.ne.s32.totalorder %s141, %s157
      %p159 = scmp.eq.s32.totalorder %s23, 0
      %p160 = por %p158, %p159
      %p161 = scmp.le.s32.totalorder 1, %s17
      %p162 = scmp.lt.s32.totalorder %s17, 3
      %p163 = pnand %p161, %p162
      %p164 = pneg %p163
      // Predicated region
      $region9: #{tpu_custom_call.1} parent=5 // pred_check
        _
      $region10: #{tpu_custom_call.1} parent=5 // pred_check_branch
        %166 = sbr.rel (%p163) target = $region12
      $region11: #{tpu_custom_call.1} parent=5 // pred_region
        %s167 = ssub.s32 %s17, 1
        // Predicated region
        $region13: #{tpu_custom_call.1} parent=11 // pred_check
          %p168 = pneg %p64
        $region14: #{tpu_custom_call.1} parent=11 // pred_check_branch
          %170 = sbr.rel (%p168) target = $region16
        $region15: #{tpu_custom_call.1} parent=11 // pred_region
          _
        $region16: #{tpu_custom_call.1} parent=11 // pred_fallthru
          _
        // Predicated region
        $region17: #{tpu_custom_call.1} parent=11 // pred_check
          %p171 = pneg %p85
        $region18: #{tpu_custom_call.1} parent=11 // pred_check_branch
          %173 = sbr.rel (%p171) target = $region20
        $region19: #{tpu_custom_call.1} parent=11 // pred_region
          _
        $region20: #{tpu_custom_call.1} parent=11 // pred_fallthru
          _
        // Predicated region
        $region21: #{tpu_custom_call.1} parent=11 // pred_check
          %p174 = pneg %p106
        $region22: #{tpu_custom_call.1} parent=11 // pred_check_branch
          %176 = sbr.rel (%p174) target = $region24
        $region23: #{tpu_custom_call.1} parent=11 // pred_region
          _
        $region24: #{tpu_custom_call.1} parent=11 // pred_fallthru
          _
        // Predicated region
        $region25: #{tpu_custom_call.1} parent=11 // pred_check
          %p177 = pneg %p127
        $region26: #{tpu_custom_call.1} parent=11 // pred_check_branch
          %179 = sbr.rel (%p177) target = $region28
        $region27: #{tpu_custom_call.1} parent=11 // pred_region
          _
        $region28: #{tpu_custom_call.1} parent=11 // pred_fallthru
          _
      $region12: #{tpu_custom_call.1} parent=5 // pred_fallthru
        _
      %p180 = scmp.lt.s32.totalorder %s17, 2
      // Predicated region
      $region29: #{tpu_custom_call.1} parent=5 // pred_check
        %p181 = pneg %p180
      $region30: #{tpu_custom_call.1} parent=5 // pred_check_branch
        %183 = sbr.rel (%p181) target = $region32
      $region31: #{tpu_custom_call.1} parent=5 // pred_region
        // Predicated region
        $region33: #{tpu_custom_call.1} parent=31 // pred_check
          %p184 = pneg %p37
        $region34: #{tpu_custom_call.1} parent=31 // pred_check_branch
          %186 = sbr.rel (%p184) target = $region36
        $region35: #{tpu_custom_call.1} parent=31 // pred_region
          %s187 = sand.u32 %s27, 1
          %s188 = scalar_lea.sflag [#allocation3], %s187
          %s189 = sand.u32 %s27, 1
          %s190 = smul.addr %s189, 256
          %s191 = scalar_lea.vmem [#allocation2], %s190
          %s193 = ssub.s32 4096, 4096
          %194 = vsyncadd %s188, %s193
          %s195 = smul.addr %s17, 32
          %s196 = smul.addr %s195, 128
          %s197 = scalar_lea.hbm %s0, %s196
          %s198 = sshll.u32 %s191, 4
          %s199 = int_to_ptr.vmem [resolvable:$true] %s198
          %204 = dma.hbm_to_vmem [thread:$0]  %s197, 4096, %s199, %s188, 256, 256, 16
        $region36: #{tpu_custom_call.1} parent=31 // pred_fallthru
          _
      $region32: #{tpu_custom_call.1} parent=5 // pred_fallthru
        _
      %p205 = scmp.le.s32.totalorder 1, %s17
      %p206 = scmp.lt.s32.totalorder %s17, 3
      %p207 = pnand %p205, %p206
      %p208 = pneg %p207
      // Predicated region
      $region37: #{tpu_custom_call.1} parent=5 // pred_check
        _
      $region38: #{tpu_custom_call.1} parent=5 // pred_check_branch
        %210 = sbr.rel (%p207) target = $region40
      $region39: #{tpu_custom_call.1} parent=5 // pred_region
        %s211 = ssub.s32 %s17, 1
        %s212 = sand.u32 %s30, 1
        %s213 = scalar_lea.sflag [#allocation3], %s212
        %s214 = sand.u32 %s30, 1
        %s215 = smul.addr %s214, 256
        %s216 = scalar_lea.vmem [#allocation2], %s215
        // Predicated region
        $region41: #{tpu_custom_call.1} parent=39 // pred_check
          %p217 = pneg %p43
        $region42: #{tpu_custom_call.1} parent=39 // pred_check_branch
          %219 = sbr.rel (%p217) target = $region44
        $region43: #{tpu_custom_call.1} parent=39 // pred_region
          %220 = dma.done %s213, 4096
        $region44: #{tpu_custom_call.1} parent=39 // pred_fallthru
          _
        %s221 = sand.u32 %s30, 1
        %s222 = scalar_lea.sflag [#allocation3], %s221
        %s223 = sand.u32 %s30, 1
        %s224 = smul.addr %s223, 256
        %s225 = scalar_lea.vmem [#allocation2], %s224
        %p226 = pneg %p43
        %p227 = pneg %p40
        %p228 = pneg %p64
        %p229 = pneg %p61
        %p230 = pneg %p85
        %p231 = pneg %p82
        %p232 = pneg %p106
        %p233 = pneg %p103
        %p234 = pneg %p127
        %p235 = pneg %p124
        %p236 = pneg %p153
        %p237 = pneg %p150
        %s238 = sand.u32 %s140, 1
        %s239 = scalar_lea.sflag [#allocation4], %s238
        %s240 = sand.u32 %s140, 1
        %s241 = smul.addr %s240, 256
        %s242 = scalar_lea.vmem [#allocation5], %s241
        %v243 = vld [vmem:[%s216] sm:$0xff]
        %v244 = vld [vmem:[%s216 + $0x8] sm:$0xff]
        %v245 = vld [vmem:[%s216 + $0x10] sm:$0xff]
        %v246 = vld [vmem:[%s216 + $0x18] sm:$0xff]
        %v247 = vld [vmem:[%s216 + $0x20] sm:$0xff]
        %v248 = vld [vmem:[%s216 + $0x28] sm:$0xff]
        %v249 = vld [vmem:[%s216 + $0x30] sm:$0xff]
        %v250 = vld [vmem:[%s216 + $0x38] sm:$0xff]
        %v251 = vld [vmem:[%s216 + $0x40] sm:$0xff]
        %v252 = vld [vmem:[%s216 + $0x48] sm:$0xff]
        %v253 = vld [vmem:[%s216 + $0x50] sm:$0xff]
        %v254 = vld [vmem:[%s216 + $0x58] sm:$0xff]
        %v255 = vld [vmem:[%s216 + $0x60] sm:$0xff]
        %v256 = vld [vmem:[%s216 + $0x68] sm:$0xff]
        %v257 = vld [vmem:[%s216 + $0x70] sm:$0xff]
        %v258 = vld [vmem:[%s216 + $0x78] sm:$0xff]
        %v259 = vld [vmem:[%s216 + $0x80] sm:$0xff]
        %v260 = vld [vmem:[%s216 + $0x88] sm:$0xff]
        %v261 = vld [vmem:[%s216 + $0x90] sm:$0xff]
        %v262 = vld [vmem:[%s216 + $0x98] sm:$0xff]
        %v263 = vld [vmem:[%s216 + $0xa0] sm:$0xff]
        %v264 = vld [vmem:[%s216 + $0xa8] sm:$0xff]
        %v265 = vld [vmem:[%s216 + $0xb0] sm:$0xff]
        %v266 = vld [vmem:[%s216 + $0xb8] sm:$0xff]
        %v267 = vld [vmem:[%s216 + $0xc0] sm:$0xff]
        %v268 = vld [vmem:[%s216 + $0xc8] sm:$0xff]
        %v269 = vld [vmem:[%s216 + $0xd0] sm:$0xff]
        %v270 = vld [vmem:[%s216 + $0xd8] sm:$0xff]
        %v271 = vld [vmem:[%s216 + $0xe0] sm:$0xff]
        %v272 = vld [vmem:[%s216 + $0xe8] sm:$0xff]
        %v273 = vld [vmem:[%s216 + $0xf0] sm:$0xff]
        %v274 = vld [vmem:[%s216 + $0xf8] sm:$0xff]
        %v275 = vadd.f32 %v243, %v244
        %276 = vadd.xlane.f32.xlu0 %v275
        %v277 = vpop.xlane.xlu0 %276
        %v278 = vadd.f32 %v245, %v246
        %279 = vadd.xlane.f32.xlu0 %v278
        %v280 = vpop.xlane.xlu0 %279
        %v281 = vadd.f32 %v247, %v248
        %282 = vadd.xlane.f32.xlu0 %v281
        %v283 = vpop.xlane.xlu0 %282
        %v284 = vadd.f32 %v249, %v250
        %285 = vadd.xlane.f32.xlu0 %v284
        %v286 = vpop.xlane.xlu0 %285
        %v287 = vadd.f32 %v251, %v252
        %288 = vadd.xlane.f32.xlu0 %v287
        %v289 = vpop.xlane.xlu0 %288
        %v290 = vadd.f32 %v253, %v254
        %291 = vadd.xlane.f32.xlu0 %v290
        %v292 = vpop.xlane.xlu0 %291
        %v293 = vadd.f32 %v255, %v256
        %294 = vadd.xlane.f32.xlu0 %v293
        %v295 = vpop.xlane.xlu0 %294
        %v296 = vadd.f32 %v257, %v258
        %297 = vadd.xlane.f32.xlu0 %v296
        %v298 = vpop.xlane.xlu0 %297
        %v299 = vadd.f32 %v259, %v260
        %300 = vadd.xlane.f32.xlu0 %v299
        %v301 = vpop.xlane.xlu0 %300
        %v302 = vadd.f32 %v261, %v262
        %303 = vadd.xlane.f32.xlu0 %v302
        %v304 = vpop.xlane.xlu0 %303
        %v305 = vadd.f32 %v263, %v264
        %306 = vadd.xlane.f32.xlu0 %v305
        %v307 = vpop.xlane.xlu0 %306
        %v308 = vadd.f32 %v265, %v266
        %309 = vadd.xlane.f32.xlu0 %v308
        %v310 = vpop.xlane.xlu0 %309
        %v311 = vadd.f32 %v267, %v268
        %312 = vadd.xlane.f32.xlu0 %v311
        %v313 = vpop.xlane.xlu0 %312
        %v314 = vadd.f32 %v269, %v270
        %315 = vadd.xlane.f32.xlu0 %v314
        %v316 = vpop.xlane.xlu0 %315
        %v317 = vadd.f32 %v271, %v272
        %318 = vadd.xlane.f32.xlu0 %v317
        %v319 = vpop.xlane.xlu0 %318
        %v320 = vadd.f32 %v273, %v274
        %321 = vadd.xlane.f32.xlu0 %v320
        %v322 = vpop.xlane.xlu0 %321
        %v323 = vmul.f32 %v277, 0.00390625
        %v324 = vmul.f32 %v280, 0.00390625
        %v325 = vmul.f32 %v283, 0.00390625
        %v326 = vmul.f32 %v286, 0.00390625
        %v327 = vmul.f32 %v289, 0.00390625
        %v328 = vmul.f32 %v292, 0.00390625
        %v329 = vmul.f32 %v295, 0.00390625
        %v330 = vmul.f32 %v298, 0.00390625
        %v331 = vmul.f32 %v301, 0.00390625
        %v332 = vmul.f32 %v304, 0.00390625
        %v333 = vmul.f32 %v307, 0.00390625
        %v334 = vmul.f32 %v310, 0.00390625
        %v335 = vmul.f32 %v313, 0.00390625
        %v336 = vmul.f32 %v316, 0.00390625
        %v337 = vmul.f32 %v319, 0.00390625
        %v338 = vmul.f32 %v322, 0.00390625
        %v339 = vld [vmem:[%s1] sm:$0xff]
        %v340 = vld [vmem:[%s1 + $0x8] sm:$0xff]
        %v341 = vld [vmem:[%s1 + $0x10] sm:$0xff]
        %v342 = vld [vmem:[%s1 + $0x18] sm:$0xff]
        %v343 = vld [vmem:[%s1 + $0x20] sm:$0xff]
        %v344 = vld [vmem:[%s1 + $0x28] sm:$0xff]
        %v345 = vld [vmem:[%s1 + $0x30] sm:$0xff]
        %v346 = vld [vmem:[%s1 + $0x38] sm:$0xff]
        %v347 = vld [vmem:[%s1 + $0x40] sm:$0xff]
        %v348 = vld [vmem:[%s1 + $0x48] sm:$0xff]
        %v349 = vld [vmem:[%s1 + $0x50] sm:$0xff]
        %v350 = vld [vmem:[%s1 + $0x58] sm:$0xff]
        %v351 = vld [vmem:[%s1 + $0x60] sm:$0xff]
        %v352 = vld [vmem:[%s1 + $0x68] sm:$0xff]
        %v353 = vld [vmem:[%s1 + $0x70] sm:$0xff]
        %v354 = vld [vmem:[%s1 + $0x78] sm:$0xff]
        %v355 = vld [vmem:[%s2] sm:$0x1]
        %v372 = vlaneseq
        %v373 = vand.u32 %v372, 127
        %v374 = vlaneseq
        %v375 = vshrl.u32 %v374, 7
        %v376 = vsub.s32 %v373, %v375
        %v377 = vrot.slane %v323, %v376
        %v378 = vadd.s32 %v373, 4294967288
        %v379 = vlaneseq
        %v380 = vshrl.u32 %v379, 7
        %v381 = vsub.s32 %v378, %v380
        %v382 = vrot.slane %v324, %v381
        %vm383 = vcmask 130112
        %v384 = vsel %vm383, %v382, %v377
        %v385 = vadd.s32 %v373, 4294967280
        %v386 = vlaneseq
        %v387 = vshrl.u32 %v386, 7
        %v388 = vsub.s32 %v385, %v387
        %v389 = vrot.slane %v325, %v388
        %vm390 = vcmask 195712
        %v391 = vsel %vm390, %v389, %v384
        %v392 = vadd.s32 %v373, 4294967272
        %v393 = vlaneseq
        %v394 = vshrl.u32 %v393, 7
        %v395 = vsub.s32 %v392, %v394
        %v396 = vrot.slane %v326, %v395
        %vm397 = vcmask 261312
        %v398 = vsel %vm397, %v396, %v391
        %v399 = vadd.s32 %v373, 4294967264
        %v400 = vlaneseq
        %v401 = vshrl.u32 %v400, 7
        %v402 = vsub.s32 %v399, %v401
        %v403 = vrot.slane %v327, %v402
        %vm404 = vcmask 326912
        %v405 = vsel %vm404, %v403, %v398
        %v406 = vadd.s32 %v373, 4294967256
        %v407 = vlaneseq
        %v408 = vshrl.u32 %v407, 7
        %v409 = vsub.s32 %v406, %v408
        %v410 = vrot.slane %v328, %v409
        %vm411 = vcmask 392512
        %v412 = vsel %vm411, %v410, %v405
        %v413 = vadd.s32 %v373, 4294967248
        %v414 = vlaneseq
        %v415 = vshrl.u32 %v414, 7
        %v416 = vsub.s32 %v413, %v415
        %v417 = vrot.slane %v329, %v416
        %vm418 = vcmask 458112
        %v419 = vsel %vm418, %v417, %v412
        %v420 = vadd.s32 %v373, 4294967240
        %v421 = vlaneseq
        %v422 = vshrl.u32 %v421, 7
        %v423 = vsub.s32 %v420, %v422
        %v424 = vrot.slane %v330, %v423
        %vm425 = vcmask 523712
        %v426 = vsel %vm425, %v424, %v419
        %v427 = vadd.s32 %v373, 4294967232
        %v428 = vlaneseq
        %v429 = vshrl.u32 %v428, 7
        %v430 = vsub.s32 %v427, %v429
        %v431 = vrot.slane %v331, %v430
        %vm432 = vcmask 589312
        %v433 = vsel %vm432, %v431, %v426
        %v434 = vadd.s32 %v373, 4294967224
        %v435 = vlaneseq
        %v436 = vshrl.u32 %v435, 7
        %v437 = vsub.s32 %v434, %v436
        %v438 = vrot.slane %v332, %v437
        %vm439 = vcmask 654912
        %v440 = vsel %vm439, %v438, %v433
        %v441 = vadd.s32 %v373, 4294967216
        %v442 = vlaneseq
        %v443 = vshrl.u32 %v442, 7
        %v444 = vsub.s32 %v441, %v443
        %v445 = vrot.slane %v333, %v444
        %vm446 = vcmask 720512
        %v447 = vsel %vm446, %v445, %v440
        %v448 = vadd.s32 %v373, 4294967208
        %v449 = vlaneseq
        %v450 = vshrl.u32 %v449, 7
        %v451 = vsub.s32 %v448, %v450
        %v452 = vrot.slane %v334, %v451
        %vm453 = vcmask 786112
        %v454 = vsel %vm453, %v452, %v447
        %v455 = vadd.s32 %v373, 4294967200
        %v456 = vlaneseq
        %v457 = vshrl.u32 %v456, 7
        %v458 = vsub.s32 %v455, %v457
        %v459 = vrot.slane %v335, %v458
        %vm460 = vcmask 851712
        %v461 = vsel %vm460, %v459, %v454
        %v462 = vadd.s32 %v373, 4294967192
        %v463 = vlaneseq
        %v464 = vshrl.u32 %v463, 7
        %v465 = vsub.s32 %v462, %v464
        %v466 = vrot.slane %v336, %v465
        %vm467 = vcmask 917312
        %v468 = vsel %vm467, %v466, %v461
        %v469 = vadd.s32 %v373, 4294967184
        %v470 = vlaneseq
        %v471 = vshrl.u32 %v470, 7
        %v472 = vsub.s32 %v469, %v471
        %v473 = vrot.slane %v337, %v472
        %vm474 = vcmask 982912
        %v475 = vsel %vm474, %v473, %v468
        %v476 = vadd.s32 %v373, 4294967176
        %v477 = vlaneseq
        %v478 = vshrl.u32 %v477, 7
        %v479 = vsub.s32 %v476, %v478
        %v480 = vrot.slane %v338, %v479
        %vm481 = vcmask 1048512
        %v482 = vsel %vm481, %v480, %v475
        %484 = vmatprep.subr.mxu0 0.0
        %485 = vmatpush1.msra.mxu0 %v339
        %486 = vmatprep.subr.mxu0 0.0
        %487 = vmatpush1.msra.mxu0 %v340
        %488 = vmatprep.subr.mxu0 0.0
        %489 = vmatpush1.msra.mxu0 %v341
        %490 = vmatprep.subr.mxu0 0.0
        %491 = vmatpush1.msra.mxu0 %v342
        %492 = vmatprep.subr.mxu0 0.0
        %493 = vmatpush1.msra.mxu0 %v343
        %494 = vmatprep.subr.mxu0 0.0
        %495 = vmatpush1.msra.mxu0 %v344
        %496 = vmatprep.subr.mxu0 0.0
        %497 = vmatpush1.msra.mxu0 %v345
        %498 = vmatprep.subr.mxu0 0.0
        %499 = vmatpush1.msra.mxu0 %v346
        %500 = vmatprep.subr.mxu0 0.0
        %501 = vmatpush1.msra.mxu0 %v347
        %502 = vmatprep.subr.mxu0 0.0
        %503 = vmatpush1.msra.mxu0 %v348
        %504 = vmatprep.subr.mxu0 0.0
        %505 = vmatpush1.msra.mxu0 %v349
        %506 = vmatprep.subr.mxu0 0.0
        %507 = vmatpush1.msra.mxu0 %v350
        %508 = vmatprep.subr.mxu0 0.0
        %509 = vmatpush1.msra.mxu0 %v351
        %510 = vmatprep.subr.mxu0 0.0
        %511 = vmatpush1.msra.mxu0 %v352
        %512 = vmatprep.subr.mxu0 0.0
        %513 = vmatpush1.msra.mxu0 %v353
        %514 = vmatprep.subr.mxu0 0.0
        %515 = vmatpush1.msra.mxu0 %v354
        %516 = vmatprep.subr.mxu0 0.0
        %517 = vmatpush1.msra.mxu0 0.0
        %518 = vmatprep.subr.mxu0 0.0
        %519 = vmatpush1.msra.mxu0 0.0
        %520 = vmatprep.subr.mxu0 0.0
        %521 = vmatpush1.msra.mxu0 0.0
        %522 = vmatprep.subr.mxu0 0.0
        %523 = vmatpush1.msra.mxu0 0.0
        %524 = vmatprep.subr.mxu0 0.0
        %525 = vmatpush1.msra.mxu0 0.0
        %526 = vmatprep.subr.mxu0 0.0
        %527 = vmatpush1.msra.mxu0 0.0
        %528 = vmatprep.subr.mxu0 0.0
        %529 = vmatpush1.msra.mxu0 0.0
        %530 = vmatprep.subr.mxu0 0.0
        %531 = vmatpush1.msra.mxu0 0.0
        %532 = vmatprep.subr.mxu0 0.0
        %533 = vmatpush1.msra.mxu0 0.0
        %534 = vmatprep.subr.mxu0 0.0
        %535 = vmatpush1.msra.mxu0 0.0
        %536 = vmatprep.subr.mxu0 0.0
        %537 = vmatpush1.msra.mxu0 0.0
        %538 = vmatprep.subr.mxu0 0.0
        %539 = vmatpush1.msra.mxu0 0.0
        %540 = vmatprep.subr.mxu0 0.0
        %541 = vmatpush1.msra.mxu0 0.0
        %542 = vmatprep.subr.mxu0 0.0
        %543 = vmatpush1.msra.mxu0 0.0
        %544 = vmatprep.subr.mxu0 0.0
        %545 = vmatpush1.msra.mxu0 0.0
        %546 = vmatprep.subr.mxu0 0.0
        %547 = vmatpush1.msra.mxu0 0.0
        %548 = vmatprep.mubr.f32.mxu0 0.0
        %549 = vmatmul.mubr.f32.gmra.mrb[0].mxu0 %v482
        %v550 = vpop.f32.mrb[0].mxu0
        %v551 = vadd.f32 %v355, %v550
        %v552 = vpop.f32.mrb[0].mxu0
        %553 = vdwg.mxu0
        %v554 = vmax.f32 %v551, 0.0
        %v555 = vld [vmem:[%s3] sm:$0xff]
        %v556 = vld [vmem:[%s3 + $0x8] sm:$0xff]
        %v557 = vld [vmem:[%s4] sm:$0x1]
        %vm558 = vcmask 130048
        %v560 = vsel %vm558, %v554, 0
        %562 = vmatprep.subr.mxu0 0.0
        %563 = vmatpush1.msra.mxu0 %v555
        %564 = vmatprep.subr.mxu0 0.0
        %565 = vmatpush1.msra.mxu0 %v556
        %566 = vmatprep.subr.mxu0 0.0
        %567 = vmatpush1.msra.mxu0 0.0
        %568 = vmatprep.subr.mxu0 0.0
        %569 = vmatpush1.msra.mxu0 0.0
        %570 = vmatprep.subr.mxu0 0.0
        %571 = vmatpush1.msra.mxu0 0.0
        %572 = vmatprep.subr.mxu0 0.0
        %573 = vmatpush1.msra.mxu0 0.0
        %574 = vmatprep.subr.mxu0 0.0
        %575 = vmatpush1.msra.mxu0 0.0
        %576 = vmatprep.subr.mxu0 0.0
        %577 = vmatpush1.msra.mxu0 0.0
        %578 = vmatprep.subr.mxu0 0.0
        %579 = vmatpush1.msra.mxu0 0.0
        %580 = vmatprep.subr.mxu0 0.0
        %581 = vmatpush1.msra.mxu0 0.0
        %582 = vmatprep.subr.mxu0 0.0
        %583 = vmatpush1.msra.mxu0 0.0
        %584 = vmatprep.subr.mxu0 0.0
        %585 = vmatpush1.msra.mxu0 0.0
        %586 = vmatprep.subr.mxu0 0.0
        %587 = vmatpush1.msra.mxu0 0.0
        %588 = vmatprep.subr.mxu0 0.0
        %589 = vmatpush1.msra.mxu0 0.0
        %590 = vmatprep.subr.mxu0 0.0
        %591 = vmatpush1.msra.mxu0 0.0
        %592 = vmatprep.subr.mxu0 0.0
        %593 = vmatpush1.msra.mxu0 0.0
        %594 = vmatprep.subr.mxu0 0.0
        %595 = vmatpush1.msra.mxu0 0.0
        %596 = vmatprep.subr.mxu0 0.0
        %597 = vmatpush1.msra.mxu0 0.0
        %598 = vmatprep.subr.mxu0 0.0
        %599 = vmatpush1.msra.mxu0 0.0
        %600 = vmatprep.subr.mxu0 0.0
        %601 = vmatpush1.msra.mxu0 0.0
        %602 = vmatprep.subr.mxu0 0.0
        %603 = vmatpush1.msra.mxu0 0.0
        %604 = vmatprep.subr.mxu0 0.0
        %605 = vmatpush1.msra.mxu0 0.0
        %606 = vmatprep.subr.mxu0 0.0
        %607 = vmatpush1.msra.mxu0 0.0
        %608 = vmatprep.subr.mxu0 0.0
        %609 = vmatpush1.msra.mxu0 0.0
        %610 = vmatprep.subr.mxu0 0.0
        %611 = vmatpush1.msra.mxu0 0.0
        %612 = vmatprep.subr.mxu0 0.0
        %613 = vmatpush1.msra.mxu0 0.0
        %614 = vmatprep.subr.mxu0 0.0
        %615 = vmatpush1.msra.mxu0 0.0
        %616 = vmatprep.subr.mxu0 0.0
        %617 = vmatpush1.msra.mxu0 0.0
        %618 = vmatprep.subr.mxu0 0.0
        %619 = vmatpush1.msra.mxu0 0.0
        %620 = vmatprep.subr.mxu0 0.0
        %621 = vmatpush1.msra.mxu0 0.0
        %622 = vmatprep.subr.mxu0 0.0
        %623 = vmatpush1.msra.mxu0 0.0
        %624 = vmatprep.subr.mxu0 0.0
        %625 = vmatpush1.msra.mxu0 0.0
        %626 = vmatprep.mubr.f32.mxu0 0.0
        %627 = vmatmul.mubr.f32.gmra.mrb[0].mxu0 %v560
        %v628 = vpop.f32.mrb[0].mxu0
        %v629 = vadd.f32 %v557, %v628
        %v630 = vpop.f32.mrb[0].mxu0
        %631 = vdwg.mxu0
        %v632 = vxor.u32 %v629, 2147483648
        %v633 = vmul.f32 %v632, 1.442695
        %v634 = vpow.pop %v633
        %v635 = vadd.f32 %v634, 1.0
        %v636 = vrcp.pop %v635
        %v637 = vmul.f32 1.0, %v636
        %v638 = vlaneseq
        %v639 = vshrl.u32 %v638, 7
        %v640 = vsub.s32 0, %v639
        %v641 = vrot.slane %v637, %v640
        %643 = vbcast.lane.b32.xlu0 %v641, 256
        %v644 = vpop.permute.xlu0 %643
        %s646 = sor.u32 256, 8
        %647 = vbcast.lane.b32.xlu0 %v641, %s646
        %v648 = vpop.permute.xlu0 %647
        %s650 = sor.u32 256, 16
        %651 = vbcast.lane.b32.xlu0 %v641, %s650
        %v652 = vpop.permute.xlu0 %651
        %s654 = sor.u32 256, 24
        %655 = vbcast.lane.b32.xlu0 %v641, %s654
        %v656 = vpop.permute.xlu0 %655
        %s658 = sor.u32 256, 32
        %659 = vbcast.lane.b32.xlu0 %v641, %s658
        %v660 = vpop.permute.xlu0 %659
        %s662 = sor.u32 256, 40
        %663 = vbcast.lane.b32.xlu0 %v641, %s662
        %v664 = vpop.permute.xlu0 %663
        %s666 = sor.u32 256, 48
        %667 = vbcast.lane.b32.xlu0 %v641, %s666
        %v668 = vpop.permute.xlu0 %667
        %s670 = sor.u32 256, 56
        %671 = vbcast.lane.b32.xlu0 %v641, %s670
        %v672 = vpop.permute.xlu0 %671
        %s674 = sor.u32 256, 64
        %675 = vbcast.lane.b32.xlu0 %v641, %s674
        %v676 = vpop.permute.xlu0 %675
        %s678 = sor.u32 256, 72
        %679 = vbcast.lane.b32.xlu0 %v641, %s678
        %v680 = vpop.permute.xlu0 %679
        %s682 = sor.u32 256, 80
        %683 = vbcast.lane.b32.xlu0 %v641, %s682
        %v684 = vpop.permute.xlu0 %683
        %s686 = sor.u32 256, 88
        %687 = vbcast.lane.b32.xlu0 %v641, %s686
        %v688 = vpop.permute.xlu0 %687
        %s690 = sor.u32 256, 96
        %691 = vbcast.lane.b32.xlu0 %v641, %s690
        %v692 = vpop.permute.xlu0 %691
        %s694 = sor.u32 256, 104
        %695 = vbcast.lane.b32.xlu0 %v641, %s694
        %v696 = vpop.permute.xlu0 %695
        %s698 = sor.u32 256, 112
        %699 = vbcast.lane.b32.xlu0 %v641, %s698
        %v700 = vpop.permute.xlu0 %699
        %s702 = sor.u32 256, 120
        %703 = vbcast.lane.b32.xlu0 %v641, %s702
        %v704 = vpop.permute.xlu0 %703
        %v705 = vmul.f32 %v243, %v644
        %v706 = vmul.f32 %v244, %v644
        %v707 = vmul.f32 %v245, %v648
        %v708 = vmul.f32 %v246, %v648
        %v709 = vmul.f32 %v247, %v652
        %v710 = vmul.f32 %v248, %v652
        %v711 = vmul.f32 %v249, %v656
        %v712 = vmul.f32 %v250, %v656
        %v713 = vmul.f32 %v251, %v660
        %v714 = vmul.f32 %v252, %v660
        %v715 = vmul.f32 %v253, %v664
        %v716 = vmul.f32 %v254, %v664
        %v717 = vmul.f32 %v255, %v668
        %v718 = vmul.f32 %v256, %v668
        %v719 = vmul.f32 %v257, %v672
        %v720 = vmul.f32 %v258, %v672
        %v721 = vmul.f32 %v259, %v676
        %v722 = vmul.f32 %v260, %v676
        %v723 = vmul.f32 %v261, %v680
        %v724 = vmul.f32 %v262, %v680
        %v725 = vmul.f32 %v263, %v684
        %v726 = vmul.f32 %v264, %v684
        %v727 = vmul.f32 %v265, %v688
        %v728 = vmul.f32 %v266, %v688
        %v729 = vmul.f32 %v267, %v692
        %v730 = vmul.f32 %v268, %v692
        %v731 = vmul.f32 %v269, %v696
        %v732 = vmul.f32 %v270, %v696
        %v733 = vmul.f32 %v271, %v700
        %v734 = vmul.f32 %v272, %v700
        %v735 = vmul.f32 %v273, %v704
        %v736 = vmul.f32 %v274, %v704
        %737 = vst [vmem:[%s242] sm:$0xff] %v705
        %738 = vst [vmem:[%s242 + $0x8] sm:$0xff] %v706
        %739 = vst [vmem:[%s242 + $0x10] sm:$0xff] %v707
        %740 = vst [vmem:[%s242 + $0x18] sm:$0xff] %v708
        %741 = vst [vmem:[%s242 + $0x20] sm:$0xff] %v709
        %742 = vst [vmem:[%s242 + $0x28] sm:$0xff] %v710
        %743 = vst [vmem:[%s242 + $0x30] sm:$0xff] %v711
        %744 = vst [vmem:[%s242 + $0x38] sm:$0xff] %v712
        %745 = vst [vmem:[%s242 + $0x40] sm:$0xff] %v713
        %746 = vst [vmem:[%s242 + $0x48] sm:$0xff] %v714
        %747 = vst [vmem:[%s242 + $0x50] sm:$0xff] %v715
        %748 = vst [vmem:[%s242 + $0x58] sm:$0xff] %v716
        %749 = vst [vmem:[%s242 + $0x60] sm:$0xff] %v717
        %750 = vst [vmem:[%s242 + $0x68] sm:$0xff] %v718
        %751 = vst [vmem:[%s242 + $0x70] sm:$0xff] %v719
        %752 = vst [vmem:[%s242 + $0x78] sm:$0xff] %v720
        %753 = vst [vmem:[%s242 + $0x80] sm:$0xff] %v721
        %754 = vst [vmem:[%s242 + $0x88] sm:$0xff] %v722
        %755 = vst [vmem:[%s242 + $0x90] sm:$0xff] %v723
        %756 = vst [vmem:[%s242 + $0x98] sm:$0xff] %v724
        %757 = vst [vmem:[%s242 + $0xa0] sm:$0xff] %v725
        %758 = vst [vmem:[%s242 + $0xa8] sm:$0xff] %v726
        %759 = vst [vmem:[%s242 + $0xb0] sm:$0xff] %v727
        %760 = vst [vmem:[%s242 + $0xb8] sm:$0xff] %v728
        %761 = vst [vmem:[%s242 + $0xc0] sm:$0xff] %v729
        %762 = vst [vmem:[%s242 + $0xc8] sm:$0xff] %v730
        %763 = vst [vmem:[%s242 + $0xd0] sm:$0xff] %v731
        %764 = vst [vmem:[%s242 + $0xd8] sm:$0xff] %v732
        %765 = vst [vmem:[%s242 + $0xe0] sm:$0xff] %v733
        %766 = vst [vmem:[%s242 + $0xe8] sm:$0xff] %v734
        %767 = vst [vmem:[%s242 + $0xf0] sm:$0xff] %v735
        %768 = vst [vmem:[%s242 + $0xf8] sm:$0xff] %v736
        %s769 = sand.u32 %s140, 1
        %s770 = scalar_lea.sflag [#allocation4], %s769
        %s771 = sand.u32 %s140, 1
        %s772 = smul.addr %s771, 256
        %s773 = scalar_lea.vmem [#allocation5], %s772
        // Predicated region
        $region45: #{tpu_custom_call.1} parent=39 // pred_check
          %p774 = pneg %p150
        $region46: #{tpu_custom_call.1} parent=39 // pred_check_branch
          %776 = sbr.rel (%p774) target = $region48
        $region47: #{tpu_custom_call.1} parent=39 // pred_region
          %s778 = ssub.s32 4096, 4096
          %779 = vsyncadd %s770, %s778
          %s780 = smul.addr %s22, 32
          %s781 = smul.addr %s780, 128
          %s782 = scalar_lea.hbm %s5, %s781
          %s783 = sshll.u32 %s773, 4
          %s784 = int_to_ptr.vmem [resolvable:$true] %s783
          %789 = dma.vmem_to_hbm [thread:$0]  %s784, 4096, %s782, %s770, 256, 256, 16
        $region48: #{tpu_custom_call.1} parent=39 // pred_fallthru
          _
      $region40: #{tpu_custom_call.1} parent=5 // pred_fallthru
        _
      %p790 = scmp.le.s32.totalorder 2, %s17
      // Predicated region
      $region49: #{tpu_custom_call.1} parent=5 // pred_check
        %p791 = pneg %p790
      $region50: #{tpu_custom_call.1} parent=5 // pred_check_branch
        %793 = sbr.rel (%p791) target = $region52
      $region51: #{tpu_custom_call.1} parent=5 // pred_region
        %s794 = ssub.s32 %s17, 2
        // Predicated region
        $region53: #{tpu_custom_call.1} parent=51 // pred_check
          %p795 = pneg %p156
        $region54: #{tpu_custom_call.1} parent=51 // pred_check_branch
          %797 = sbr.rel (%p795) target = $region56
        $region55: #{tpu_custom_call.1} parent=51 // pred_region
          %s798 = sand.u32 %s141, 1
          %s799 = scalar_lea.sflag [#allocation4], %s798
          %s800 = sand.u32 %s141, 1
          %s801 = smul.addr %s800, 256
          %s802 = scalar_lea.vmem [#allocation5], %s801
          %803 = dma.done %s799, 4096
        $region56: #{tpu_custom_call.1} parent=51 // pred_fallthru
          _
      $region52: #{tpu_custom_call.1} parent=5 // pred_fallthru
        _
    $region6: #{tpu_custom_call.1} parent=1 // loop_footer
      %s21 = sadd.s32 1, %s17
    $region7: #{tpu_custom_call.1} parent=1 // loop_footer_branch
      %16 = sbr.rel target = $region3
    $region8: #{tpu_custom_call.1} parent=1 // loop_exit
      _
    %804 = vsyncpa [#allocation3], 1
    %s805 = scalar_lea.sflag [#allocation3], 1
    %806 = vsyncpa %s805, 1
    %807 = vsyncpa [#allocation4], 1
    %s808 = scalar_lea.sflag [#allocation4], 1
    %809 = vsyncpa %s808, 1

</llo_original>
